<compile_context>
chip_gen: v6e
topology: v6e:2x2x1
jax: 0.10.0
libtpu: 0.0.40
codegen_flags: <defaults>
</compile_context>

<pallas_src>
import jax
import jax.numpy as jnp
from jax.experimental import pallas as pl
from jax.experimental.pallas import tpu as pltpu

SDF_NET_BREADTH = 256
_OUT_PAD = 128      # pad final layer to one full lane width -> unmasked stores
_MAX_TILE_B = 1024  # batch-tile cap (bf16 activations) - comfortably fits VMEM
_MIN_TILE_B = 16    # bf16 sublane packing


def _round_up(x, m):
    return (x + m - 1) // m * m


def _mlp_kernel(x_ref,
                w1_ref, b1_ref,
                w2_ref, b2_ref,
                w3_ref, b3_ref,
                w4_ref, b4_ref,
                o_ref):
    # bf16 operands on the MXU, f32 accumulation, f32 bias+ReLU, bf16 re-cast
    # for the next MXU pass.
    x = x_ref[...]

    h = jnp.dot(x, w1_ref[...], preferred_element_type=jnp.float32) + b1_ref[...]
    h = jnp.maximum(h, 0.0).astype(jnp.bfloat16)

    h = jnp.dot(h, w2_ref[...], preferred_element_type=jnp.float32) + b2_ref[...]
    h = jnp.maximum(h, 0.0).astype(jnp.bfloat16)

    h = jnp.dot(h, w3_ref[...], preferred_element_type=jnp.float32) + b3_ref[...]
    h = jnp.maximum(h, 0.0).astype(jnp.bfloat16)

    # Final layer: true out_features is 1; w4/b4 are zero-padded to 128 columns
    # so the result/output block is lane-dense. Column 0 holds the real value.
    out = jnp.dot(h, w4_ref[...], preferred_element_type=jnp.float32) + b4_ref[...]
    out = jnp.maximum(out, 0.0)

    o_ref[...] = out.astype(o_ref.dtype)


def model_d_forward(w, params, *, tile_b=None):
    """Run the ModelD discriminator MLP.

    w:      [B, 256] (any float dtype; cast to bf16 for the MXU)
    params: dict with w1..w4 stored as [in, out] and b1..b4 as [1, out].
    Returns [B, 1] in w.dtype.
    """
    B, D = w.shape
    assert D == SDF_NET_BREADTH

    if tile_b is None:
        tile_b = min(_MAX_TILE_B, _round_up(max(B, 1), _MIN_TILE_B))
    assert tile_b % _MIN_TILE_B == 0, tile_b

    b_pad = _round_up(B, tile_b)
    x = w.astype(jnp.bfloat16)
    if b_pad != B:
        x = jnp.pad(x, ((0, b_pad - B), (0, 0)))

    # bf16 weights (MXU inputs); biases stay f32 (added on the f32 accumulator).
    w1 = params["w1"].astype(jnp.bfloat16)
    w2 = params["w2"].astype(jnp.bfloat16)
    w3 = params["w3"].astype(jnp.bfloat16)
    b1 = params["b1"].astype(jnp.float32)
    b2 = params["b2"].astype(jnp.float32)
    b3 = params["b3"].astype(jnp.float32)
    # Zero-pad the 1-wide last layer to a full 128-lane column block.
    w4 = jnp.zeros((D, _OUT_PAD), jnp.bfloat16).at[:, 0:1].set(
        params["w4"].astype(jnp.bfloat16))
    b4 = jnp.zeros((1, _OUT_PAD), jnp.float32).at[:, 0:1].set(
        params["b4"].astype(jnp.float32))

    grid = (b_pad // tile_b,)

    # Constant index_map -> the block never changes across grid steps, so these
    # are DMA'd into VMEM once and reused (weights are tiny: ~460 KiB total).
    def whole(shape):
        return pl.BlockSpec(shape, lambda i: tuple(0 for _ in shape))

    in_specs = [
        pl.BlockSpec((tile_b, D), lambda i: (i, 0)),   # x batch tile
        whole((D, D)), whole((1, D)),                  # layer 1
        whole((D, D)), whole((1, D)),                  # layer 2
        whole((D, D)), whole((1, D)),                  # layer 3
        whole((D, _OUT_PAD)), whole((1, _OUT_PAD)),    # layer 4 (padded)
    ]
    out_specs = pl.BlockSpec((tile_b, _OUT_PAD), lambda i: (i, 0))

    out = pl.pallas_call(
        _mlp_kernel,
        out_shape=jax.ShapeDtypeStruct((b_pad, _OUT_PAD), jnp.bfloat16),
        grid=grid,
        in_specs=in_specs,
        out_specs=out_specs,
        compiler_params=pltpu.CompilerParams(
            dimension_semantics=("parallel",),
            vmem_limit_bytes=32 * 1024 * 1024),
    )(x, w1, b1, w2, b2, w3, b3, w4, b4)

    return out[:B, 0:1].astype(w.dtype)


def init_params(key, dtype=jnp.float32):
    """Deterministic init matching the PyTorch layer shapes.

    nn.Linear(in, out) has weight [out, in]; we store the transpose [in, out]
    so the kernel does x @ W.
    """
    D = SDF_NET_BREADTH
    keys = jax.random.split(key, 8)

    def linear(kw, kb, fan_in, fan_out):
        bound = 1.0 / jnp.sqrt(fan_in)
        wt = jax.random.uniform(kw, (fan_out, fan_in), dtype, -bound, bound)
        b = jax.random.uniform(kb, (fan_out,), dtype, -bound, bound)
        return wt.T, b.reshape(1, fan_out)   # stored as [in, out], [1, out]

    w1, b1 = linear(keys[0], keys[1], D, D)
    w2, b2 = linear(keys[2], keys[3], D, D)
    w3, b3 = linear(keys[4], keys[5], D, D)
    w4, b4 = linear(keys[6], keys[7], D, 1)
    return dict(w1=w1, b1=b1, w2=w2, b2=b2, w3=w3, b3=b3, w4=w4, b4=b4)


def _reference(w, p):
    """Pure-jnp reference mirroring the kernel's bf16/f32 mixed precision."""
    def layer(h, wt, b):
        acc = jnp.dot(h.astype(jnp.bfloat16), wt.astype(jnp.bfloat16),
                      preferred_element_type=jnp.float32)
        return jnp.maximum(acc + b.astype(jnp.float32), 0.0)

    h = layer(w, p["w1"], p["b1"])
    h = layer(h, p["w2"], p["b2"])
    h = layer(h, p["w3"], p["b3"])
    out = layer(h, p["w4"], p["b4"])
    return out.astype(jnp.bfloat16).astype(w.dtype)   # kernel stores bf16


if __name__ == "__main__":
    key = jax.random.PRNGKey(0)
    k_params, k_x1, k_x2 = jax.random.split(key, 3)

    params = init_params(k_params)

    # Small batch of SDF feature vectors (as in the original use case).
    B = 8
    x = jax.random.normal(k_x1, (B, SDF_NET_BREADTH), jnp.float32)
    out = jax.block_until_ready(model_d_forward(x, params))
    ref = _reference(x, params)
    assert out.shape == (B, 1), out.shape
    assert jnp.allclose(out, ref, atol=2e-2, rtol=2e-2), (
        float(jnp.max(jnp.abs(out - ref))))

    # Exercise the tiled / padded path (grid > 1, non-multiple batch).
    B2 = 40
    x2 = jax.random.normal(k_x2, (B2, SDF_NET_BREADTH), jnp.float32)
    out2 = jax.block_until_ready(model_d_forward(x2, params, tile_b=16))
    ref2 = _reference(x2, params)
    assert out2.shape == (B2, 1), out2.shape
    assert jnp.allclose(out2, ref2, atol=2e-2, rtol=2e-2), (
        float(jnp.max(jnp.abs(out2 - ref2))))

    print("KERNEL_OK")
</pallas_src>

<mosaic_0001>
module attributes {stable_mosaic.version = 11 : i64} {
  func.func @_mlp_kernel(%arg0: i32, %arg1: memref<16x256xbf16, #tpu.memory_space<vmem>>, %arg2: memref<256x256xbf16, #tpu.memory_space<vmem>>, %arg3: memref<1x256xf32, #tpu.memory_space<vmem>>, %arg4: memref<256x256xbf16, #tpu.memory_space<vmem>>, %arg5: memref<1x256xf32, #tpu.memory_space<vmem>>, %arg6: memref<256x256xbf16, #tpu.memory_space<vmem>>, %arg7: memref<1x256xf32, #tpu.memory_space<vmem>>, %arg8: memref<256x128xbf16, #tpu.memory_space<vmem>>, %arg9: memref<1x128xf32, #tpu.memory_space<vmem>>, %arg10: memref<16x128xbf16, #tpu.memory_space<vmem>>) attributes {dimension_semantics = [#tpu.dimension_semantics<parallel>], iteration_bounds = array<i64: 1>, scalar_prefetch = 0 : i64, scratch_operands = 0 : i64, tpu.core_type = #tpu.core_type<tc>, window_params = [{transform_indices = @transform_0, window_bounds = array<i64: 16, 256>}, {pipeline_mode = #tpu.pipeline_mode<synchronous>, transform_indices = @transform_1, window_bounds = array<i64: 256, 256>}, {pipeline_mode = #tpu.pipeline_mode<synchronous>, transform_indices = @transform_2, window_bounds = array<i64: 1, 256>}, {pipeline_mode = #tpu.pipeline_mode<synchronous>, transform_indices = @transform_3, window_bounds = array<i64: 256, 256>}, {pipeline_mode = #tpu.pipeline_mode<synchronous>, transform_indices = @transform_4, window_bounds = array<i64: 1, 256>}, {pipeline_mode = #tpu.pipeline_mode<synchronous>, transform_indices = @transform_5, window_bounds = array<i64: 256, 256>}, {pipeline_mode = #tpu.pipeline_mode<synchronous>, transform_indices = @transform_6, window_bounds = array<i64: 1, 256>}, {pipeline_mode = #tpu.pipeline_mode<synchronous>, transform_indices = @transform_7, window_bounds = array<i64: 256, 128>}, {pipeline_mode = #tpu.pipeline_mode<synchronous>, transform_indices = @transform_8, window_bounds = array<i64: 1, 128>}, {transform_indices = @transform_9, window_bounds = array<i64: 16, 128>}]} {
    %c0 = arith.constant 0 : index
    %c0_0 = arith.constant 0 : index
    %0 = vector.load %arg1[%c0, %c0_0] : memref<16x256xbf16, #tpu.memory_space<vmem>>, vector<16x256xbf16>
    %c0_1 = arith.constant 0 : index
    %c0_2 = arith.constant 0 : index
    %1 = vector.load %arg2[%c0_1, %c0_2] : memref<256x256xbf16, #tpu.memory_space<vmem>>, vector<256x256xbf16>
    %cst = arith.constant dense<0.000000e+00> : vector<16x256xf32>
    %2 = tpu.matmul %0, %1, %cst {dimension_numbers = #tpu.dot_dimension_numbers<[1], [0], [0], [1], [0, 0, 1, 1], [], []>} : vector<16x256xbf16>, vector<256x256xbf16>, vector<16x256xf32> -> vector<16x256xf32>
    %c0_3 = arith.constant 0 : index
    %c0_4 = arith.constant 0 : index
    %3 = vector.load %arg3[%c0_3, %c0_4] : memref<1x256xf32, #tpu.memory_space<vmem>>, vector<1x256xf32>
    %4 = vector.broadcast %3 : vector<1x256xf32> to vector<16x256xf32>
    %5 = arith.addf %2, %4 : vector<16x256xf32>
    %cst_5 = arith.constant 0.000000e+00 : f32
    %6 = vector.broadcast %cst_5 : f32 to vector<16x256xf32>
    %7 = arith.maximumf %5, %6 : vector<16x256xf32>
    %8 = arith.truncf %7 : vector<16x256xf32> to vector<16x256xbf16>
    %c0_6 = arith.constant 0 : index
    %c0_7 = arith.constant 0 : index
    %9 = vector.load %arg4[%c0_6, %c0_7] : memref<256x256xbf16, #tpu.memory_space<vmem>>, vector<256x256xbf16>
    %cst_8 = arith.constant dense<0.000000e+00> : vector<16x256xf32>
    %10 = tpu.matmul %8, %9, %cst_8 {dimension_numbers = #tpu.dot_dimension_numbers<[1], [0], [0], [1], [0, 0, 1, 1], [], []>} : vector<16x256xbf16>, vector<256x256xbf16>, vector<16x256xf32> -> vector<16x256xf32>
    %c0_9 = arith.constant 0 : index
    %c0_10 = arith.constant 0 : index
    %11 = vector.load %arg5[%c0_9, %c0_10] : memref<1x256xf32, #tpu.memory_space<vmem>>, vector<1x256xf32>
    %12 = vector.broadcast %11 : vector<1x256xf32> to vector<16x256xf32>
    %13 = arith.addf %10, %12 : vector<16x256xf32>
    %cst_11 = arith.constant 0.000000e+00 : f32
    %14 = vector.broadcast %cst_11 : f32 to vector<16x256xf32>
    %15 = arith.maximumf %13, %14 : vector<16x256xf32>
    %16 = arith.truncf %15 : vector<16x256xf32> to vector<16x256xbf16>
    %c0_12 = arith.constant 0 : index
    %c0_13 = arith.constant 0 : index
    %17 = vector.load %arg6[%c0_12, %c0_13] : memref<256x256xbf16, #tpu.memory_space<vmem>>, vector<256x256xbf16>
    %cst_14 = arith.constant dense<0.000000e+00> : vector<16x256xf32>
    %18 = tpu.matmul %16, %17, %cst_14 {dimension_numbers = #tpu.dot_dimension_numbers<[1], [0], [0], [1], [0, 0, 1, 1], [], []>} : vector<16x256xbf16>, vector<256x256xbf16>, vector<16x256xf32> -> vector<16x256xf32>
    %c0_15 = arith.constant 0 : index
    %c0_16 = arith.constant 0 : index
    %19 = vector.load %arg7[%c0_15, %c0_16] : memref<1x256xf32, #tpu.memory_space<vmem>>, vector<1x256xf32>
    %20 = vector.broadcast %19 : vector<1x256xf32> to vector<16x256xf32>
    %21 = arith.addf %18, %20 : vector<16x256xf32>
    %cst_17 = arith.constant 0.000000e+00 : f32
    %22 = vector.broadcast %cst_17 : f32 to vector<16x256xf32>
    %23 = arith.maximumf %21, %22 : vector<16x256xf32>
    %24 = arith.truncf %23 : vector<16x256xf32> to vector<16x256xbf16>
    %c0_18 = arith.constant 0 : index
    %c0_19 = arith.constant 0 : index
    %25 = vector.load %arg8[%c0_18, %c0_19] : memref<256x128xbf16, #tpu.memory_space<vmem>>, vector<256x128xbf16>
    %cst_20 = arith.constant dense<0.000000e+00> : vector<16x128xf32>
    %26 = tpu.matmul %24, %25, %cst_20 {dimension_numbers = #tpu.dot_dimension_numbers<[1], [0], [0], [1], [0, 0, 1, 1], [], []>} : vector<16x256xbf16>, vector<256x128xbf16>, vector<16x128xf32> -> vector<16x128xf32>
    %c0_21 = arith.constant 0 : index
    %c0_22 = arith.constant 0 : index
    %27 = vector.load %arg9[%c0_21, %c0_22] : memref<1x128xf32, #tpu.memory_space<vmem>>, vector<1x128xf32>
    %28 = vector.broadcast %27 : vector<1x128xf32> to vector<16x128xf32>
    %29 = arith.addf %26, %28 : vector<16x128xf32>
    %cst_23 = arith.constant 0.000000e+00 : f32
    %30 = vector.broadcast %cst_23 : f32 to vector<16x128xf32>
    %31 = arith.maximumf %29, %30 : vector<16x128xf32>
    %32 = arith.truncf %31 : vector<16x128xf32> to vector<16x128xbf16>
    %c0_24 = arith.constant 0 : index
    %c0_25 = arith.constant 0 : index
    %33 = vector.load %arg10[%c0_24, %c0_25] : memref<16x128xbf16, #tpu.memory_space<vmem>>, vector<16x128xbf16>
    tpu.vector_store %arg10[%c0_24, %c0_25], %32 {strides = array<i32>} : memref<16x128xbf16, #tpu.memory_space<vmem>>, vector<16x128xbf16>,
    return
  }
  func.func @transform_0(%arg0: i32) -> (i32, i32) {
    %c0_i32 = arith.constant 0 : i32
    %c0_i32_0 = arith.constant 0 : i32
    return %arg0, %c0_i32 : i32, i32
  }
  func.func @transform_1(%arg0: i32) -> (i32, i32) {
    %c0_i32 = arith.constant 0 : i32
    %c0_i32_0 = arith.constant 0 : i32
    %c0_i32_1 = arith.constant 0 : i32
    return %c0_i32, %c0_i32_0 : i32, i32
  }
  func.func @transform_2(%arg0: i32) -> (i32, i32) {
    %c0_i32 = arith.constant 0 : i32
    %c0_i32_0 = arith.constant 0 : i32
    %c0_i32_1 = arith.constant 0 : i32
    return %c0_i32, %c0_i32_0 : i32, i32
  }
  func.func @transform_3(%arg0: i32) -> (i32, i32) {
    %c0_i32 = arith.constant 0 : i32
    %c0_i32_0 = arith.constant 0 : i32
    %c0_i32_1 = arith.constant 0 : i32
    return %c0_i32, %c0_i32_0 : i32, i32
  }
  func.func @transform_4(%arg0: i32) -> (i32, i32) {
    %c0_i32 = arith.constant 0 : i32
    %c0_i32_0 = arith.constant 0 : i32
    %c0_i32_1 = arith.constant 0 : i32
    return %c0_i32, %c0_i32_0 : i32, i32
  }
  func.func @transform_5(%arg0: i32) -> (i32, i32) {
    %c0_i32 = arith.constant 0 : i32
    %c0_i32_0 = arith.constant 0 : i32
    %c0_i32_1 = arith.constant 0 : i32
    return %c0_i32, %c0_i32_0 : i32, i32
  }
  func.func @transform_6(%arg0: i32) -> (i32, i32) {
    %c0_i32 = arith.constant 0 : i32
    %c0_i32_0 = arith.constant 0 : i32
    %c0_i32_1 = arith.constant 0 : i32
    return %c0_i32, %c0_i32_0 : i32, i32
  }
  func.func @transform_7(%arg0: i32) -> (i32, i32) {
    %c0_i32 = arith.constant 0 : i32
    %c0_i32_0 = arith.constant 0 : i32
    %c0_i32_1 = arith.constant 0 : i32
    return %c0_i32, %c0_i32_0 : i32, i32
  }
  func.func @transform_8(%arg0: i32) -> (i32, i32) {
    %c0_i32 = arith.constant 0 : i32
    %c0_i32_0 = arith.constant 0 : i32
    %c0_i32_1 = arith.constant 0 : i32
    return %c0_i32, %c0_i32_0 : i32, i32
  }
  func.func @transform_9(%arg0: i32) -> (i32, i32) {
    %c0_i32 = arith.constant 0 : i32
    %c0_i32_0 = arith.constant 0 : i32
    return %arg0, %c0_i32 : i32, i32
  }
}

</mosaic_0001>

<llo_original>
// kernel: tpu_custom_call.1
$region0: #{tpu_custom_call.1}
  #allocation0 [shape = 'u32[]', space=smem, size = 0x4, offset = 0x4, fixed_abs, tag = 'smem constant byte address 0x4 - core index']
  #allocation1 [shape = 'u32[144,128]{1,0:T(1,128)}', space=vmem, size = 0x12000, scoped, tag = 'internal scratch']
  %s0 = inlined_call_operand.hbm [shape: bf16[16,256], index: 0, kind: input, shape index: {}]
  %s1 = inlined_call_operand.hbm [shape: bf16[256,256], index: 1, kind: input, shape index: {}]
  %s2 = inlined_call_operand.vmem [shape: f32[1,256], index: 2, kind: input, shape index: {}]
  %s3 = inlined_call_operand.hbm [shape: bf16[256,256], index: 3, kind: input, shape index: {}]
  %s4 = inlined_call_operand.vmem [shape: f32[1,256], index: 4, kind: input, shape index: {}]
  %s5 = inlined_call_operand.hbm [shape: bf16[256,256], index: 5, kind: input, shape index: {}]
  %s6 = inlined_call_operand.vmem [shape: f32[1,256], index: 6, kind: input, shape index: {}]
  %s7 = inlined_call_operand.hbm [shape: bf16[256,128], index: 7, kind: input, shape index: {}]
  %s8 = inlined_call_operand.vmem [shape: f32[1,128], index: 8, kind: input, shape index: {}]
  %s9 = inlined_call_operand.hbm [shape: bf16[16,128], index: 9, kind: output, shape index: {}]
  %s10 = sld [smem:[#allocation0]]
  $region66: #{tpu_custom_call.1} parent=0
    _
  %s12 = ssub.s32 1, %s10
  %s13 = scalar_select 0, %s12, %s10
  $region1: #{tpu_custom_call.1} parent=0
    #allocation2 [shape = 'u8[8192]{0}', space=vmem, size = 0x2000, scoped, tag = 'input window, operand 0, single buffered']
    #allocation3 [shape = 's32[1]{0}', space=sflag, size = 0x4, scoped, tag = 'scoped memory for tpu_custom_call.1']
    #allocation4 [shape = 's32[1]{0}', space=sflag, size = 0x4, scoped, tag = 'scoped memory for tpu_custom_call.1']
    #allocation5 [shape = 'u8[131072]{0}', space=vmem, size = 0x20000, scoped, tag = 'input window, operand 1, single buffered']
    #allocation6 [shape = 's32[1]{0}', space=sflag, size = 0x4, scoped, tag = 'scoped memory for tpu_custom_call.1']
    #allocation7 [shape = 'u8[131072]{0}', space=vmem, size = 0x20000, scoped, tag = 'input window, operand 3, single buffered']
    #allocation8 [shape = 'u8[131072]{0}', space=vmem, size = 0x20000, scoped, tag = 'input window, operand 5, single buffered']
    #allocation9 [shape = 's32[1]{0}', space=sflag, size = 0x4, scoped, tag = 'scoped memory for tpu_custom_call.1']
    #allocation10 [shape = 'u8[65536]{0}', space=vmem, size = 0x10000, scoped, tag = 'input window, operand 7, single buffered']
    #allocation11 [shape = 'u8[4096]{0}', space=vmem, size = 0x1000, scoped, tag = 'output window, operand 0, single buffered']
    %14 = vsyncpa [#allocation3], 0
    %15 = vsyncpa [#allocation6], 0
    %16 = vsyncpa [#allocation9], 0
    %17 = vsyncpa [#allocation4], 0
    // Predicated region
    $region2: #{tpu_custom_call.1} parent=1 // pred_check
      _
    $region3: #{tpu_custom_call.1} parent=1 // pred_check_branch
      %19 = sbr.rel (0) target = $region5
    $region4: #{tpu_custom_call.1} parent=1 // pred_region
      %s21 = ssub.s32 256, 256
      %22 = vsyncadd [#allocation3], %s21
      %s23 = sshll.u32 [#allocation2], 4
      %s24 = int_to_ptr.vmem [resolvable:$true] %s23
      %29 = dma.hbm_to_vmem [thread:$0]  %s0, 256, %s24, [#allocation3], 128, 128, 8
    $region5: #{tpu_custom_call.1} parent=1 // pred_fallthru
      _
    // Predicated region
    $region6: #{tpu_custom_call.1} parent=1 // pred_check
      _
    $region7: #{tpu_custom_call.1} parent=1 // pred_check_branch
      %31 = sbr.rel (0) target = $region9
    $region8: #{tpu_custom_call.1} parent=1 // pred_region
      %s33 = ssub.s32 4096, 4096
      %34 = vsyncadd [#allocation6], %s33
      %s35 = sshll.u32 [#allocation5], 4
      %s36 = int_to_ptr.vmem [resolvable:$true] %s35
      %41 = dma.hbm_to_vmem [thread:$0]  %s1, 4096, %s36, [#allocation6], 128, 128, 8
    $region9: #{tpu_custom_call.1} parent=1 // pred_fallthru
      _
    // Predicated region
    $region10: #{tpu_custom_call.1} parent=1 // pred_check
      _
    $region11: #{tpu_custom_call.1} parent=1 // pred_check_branch
      %43 = sbr.rel (0) target = $region13
    $region12: #{tpu_custom_call.1} parent=1 // pred_region
      _
    $region13: #{tpu_custom_call.1} parent=1 // pred_fallthru
      _
    // Predicated region
    $region14: #{tpu_custom_call.1} parent=1 // pred_check
      _
    $region15: #{tpu_custom_call.1} parent=1 // pred_check_branch
      %45 = sbr.rel (0) target = $region17
    $region16: #{tpu_custom_call.1} parent=1 // pred_region
      %s47 = ssub.s32 4096, 4096
      %48 = vsyncadd [#allocation6], %s47
      %s49 = sshll.u32 [#allocation7], 4
      %s50 = int_to_ptr.vmem [resolvable:$true] %s49
      %55 = dma.hbm_to_vmem [thread:$0]  %s3, 4096, %s50, [#allocation6], 128, 128, 8
    $region17: #{tpu_custom_call.1} parent=1 // pred_fallthru
      _
    // Predicated region
    $region18: #{tpu_custom_call.1} parent=1 // pred_check
      _
    $region19: #{tpu_custom_call.1} parent=1 // pred_check_branch
      %57 = sbr.rel (0) target = $region21
    $region20: #{tpu_custom_call.1} parent=1 // pred_region
      _
    $region21: #{tpu_custom_call.1} parent=1 // pred_fallthru
      _
    // Predicated region
    $region22: #{tpu_custom_call.1} parent=1 // pred_check
      _
    $region23: #{tpu_custom_call.1} parent=1 // pred_check_branch
      %59 = sbr.rel (0) target = $region25
    $region24: #{tpu_custom_call.1} parent=1 // pred_region
      %s61 = ssub.s32 4096, 4096
      %62 = vsyncadd [#allocation9], %s61
      %s63 = sshll.u32 [#allocation8], 4
      %s64 = int_to_ptr.vmem [resolvable:$true] %s63
      %69 = dma.hbm_to_vmem [thread:$0]  %s5, 4096, %s64, [#allocation9], 128, 128, 8
    $region25: #{tpu_custom_call.1} parent=1 // pred_fallthru
      _
    // Predicated region
    $region26: #{tpu_custom_call.1} parent=1 // pred_check
      _
    $region27: #{tpu_custom_call.1} parent=1 // pred_check_branch
      %71 = sbr.rel (0) target = $region29
    $region28: #{tpu_custom_call.1} parent=1 // pred_region
      _
    $region29: #{tpu_custom_call.1} parent=1 // pred_fallthru
      _
    // Predicated region
    $region30: #{tpu_custom_call.1} parent=1 // pred_check
      _
    $region31: #{tpu_custom_call.1} parent=1 // pred_check_branch
      %73 = sbr.rel (0) target = $region33
    $region32: #{tpu_custom_call.1} parent=1 // pred_region
      %s75 = ssub.s32 2048, 2048
      %76 = vsyncadd [#allocation9], %s75
      %s77 = sshll.u32 [#allocation10], 4
      %s78 = int_to_ptr.vmem [resolvable:$true] %s77
      %83 = dma.hbm_to_vmem [thread:$0]  %s7, 2048, %s78, [#allocation9], 64, 64, 4
    $region33: #{tpu_custom_call.1} parent=1 // pred_fallthru
      _
    // Predicated region
    $region34: #{tpu_custom_call.1} parent=1 // pred_check
      _
    $region35: #{tpu_custom_call.1} parent=1 // pred_check_branch
      %85 = sbr.rel (0) target = $region37
    $region36: #{tpu_custom_call.1} parent=1 // pred_region
      _
    $region37: #{tpu_custom_call.1} parent=1 // pred_fallthru
      _
    // Predicated region
    $region38: #{tpu_custom_call.1} parent=1 // pred_check
      _
    $region39: #{tpu_custom_call.1} parent=1 // pred_check_branch
      %87 = sbr.rel (0) target = $region41
    $region40: #{tpu_custom_call.1} parent=1 // pred_region
      %88 = dma.done [#allocation3], 256
    $region41: #{tpu_custom_call.1} parent=1 // pred_fallthru
      _
    // Predicated region
    $region42: #{tpu_custom_call.1} parent=1 // pred_check
      _
    $region43: #{tpu_custom_call.1} parent=1 // pred_check_branch
      %90 = sbr.rel (0) target = $region45
    $region44: #{tpu_custom_call.1} parent=1 // pred_region
      %91 = dma.done [#allocation6], 4096
    $region45: #{tpu_custom_call.1} parent=1 // pred_fallthru
      _
    // Predicated region
    $region46: #{tpu_custom_call.1} parent=1 // pred_check
      _
    $region47: #{tpu_custom_call.1} parent=1 // pred_check_branch
      %93 = sbr.rel (0) target = $region49
    $region48: #{tpu_custom_call.1} parent=1 // pred_region
      %94 = dma.done [#allocation6], 4096
    $region49: #{tpu_custom_call.1} parent=1 // pred_fallthru
      _
    // Predicated region
    $region50: #{tpu_custom_call.1} parent=1 // pred_check
      _
    $region51: #{tpu_custom_call.1} parent=1 // pred_check_branch
      %96 = sbr.rel (0) target = $region53
    $region52: #{tpu_custom_call.1} parent=1 // pred_region
      %97 = dma.done [#allocation9], 4096
    $region53: #{tpu_custom_call.1} parent=1 // pred_fallthru
      _
    // Predicated region
    $region54: #{tpu_custom_call.1} parent=1 // pred_check
      _
    $region55: #{tpu_custom_call.1} parent=1 // pred_check_branch
      %99 = sbr.rel (0) target = $region57
    $region56: #{tpu_custom_call.1} parent=1 // pred_region
      %100 = dma.done [#allocation9], 2048
    $region57: #{tpu_custom_call.1} parent=1 // pred_fallthru
      _
    %v102 = vld [vmem:[#allocation2] sm:$0xff]
    %v103 = vld [vmem:[#allocation2 + $0x8] sm:$0xff]
    %v104 = vld [vmem:[#allocation5] sm:$0xff]
    %v105 = vld [vmem:[#allocation5 + $0x8] sm:$0xff]
    %v106 = vld [vmem:[#allocation5 + $0x10] sm:$0xff]
    %v107 = vld [vmem:[#allocation5 + $0x18] sm:$0xff]
    %v108 = vld [vmem:[#allocation5 + $0x20] sm:$0xff]
    %v109 = vld [vmem:[#allocation5 + $0x28] sm:$0xff]
    %v110 = vld [vmem:[#allocation5 + $0x30] sm:$0xff]
    %v111 = vld [vmem:[#allocation5 + $0x38] sm:$0xff]
    %v112 = vld [vmem:[#allocation5 + $0x40] sm:$0xff]
    %v113 = vld [vmem:[#allocation5 + $0x48] sm:$0xff]
    %v114 = vld [vmem:[#allocation5 + $0x50] sm:$0xff]
    %v115 = vld [vmem:[#allocation5 + $0x58] sm:$0xff]
    %v116 = vld [vmem:[#allocation5 + $0x60] sm:$0xff]
    %v117 = vld [vmem:[#allocation5 + $0x68] sm:$0xff]
    %v118 = vld [vmem:[#allocation5 + $0x70] sm:$0xff]
    %v119 = vld [vmem:[#allocation5 + $0x78] sm:$0xff]
    %v120 = vld [vmem:[#allocation5 + $0x80] sm:$0xff]
    %v121 = vld [vmem:[#allocation5 + $0x88] sm:$0xff]
    %v122 = vld [vmem:[#allocation5 + $0x90] sm:$0xff]
    %v123 = vld [vmem:[#allocation5 + $0x98] sm:$0xff]
    %v124 = vld [vmem:[#allocation5 + $0xa0] sm:$0xff]
    %v125 = vld [vmem:[#allocation5 + $0xa8] sm:$0xff]
    %v126 = vld [vmem:[#allocation5 + $0xb0] sm:$0xff]
    %v127 = vld [vmem:[#allocation5 + $0xb8] sm:$0xff]
    %v128 = vld [vmem:[#allocation5 + $0xc0] sm:$0xff]
    %v129 = vld [vmem:[#allocation5 + $0xc8] sm:$0xff]
    %v130 = vld [vmem:[#allocation5 + $0xd0] sm:$0xff]
    %v131 = vld [vmem:[#allocation5 + $0xd8] sm:$0xff]
    %v132 = vld [vmem:[#allocation5 + $0xe0] sm:$0xff]
    %v133 = vld [vmem:[#allocation5 + $0xe8] sm:$0xff]
    %v134 = vld [vmem:[#allocation5 + $0xf0] sm:$0xff]
    %v135 = vld [vmem:[#allocation5 + $0xf8] sm:$0xff]
    %v136 = vld [vmem:[%s2] sm:$0x3]
    %v138 = vlaneseq
    %v139 = vshrl.u32 %v138, 7
    %v140 = vsub.s32 0, %v139
    %v141 = vrot.slane %v136, %v140
    %v142 = vlaneseq
    %v143 = vshrl.u32 %v142, 7
    %v144 = vsub.s32 1, %v143
    %v145 = vrot.slane %v136, %v144
    %v150 = vunpack.c.l.b16 %v102
    %v151 = vunpack.c.h.b16 %v102
    %v152 = vunpack.c.l.b16 %v103
    %v153 = vunpack.c.h.b16 %v103
    %v154 = vpack.c.b16 %v152, %v150
    %v155 = vpack.c.b16 %v153, %v151
    %v190 = vunpack.c.l.b16 %v104
    %v191 = vunpack.c.h.b16 %v104
    %v192 = vunpack.c.l.b16 %v105
    %v193 = vunpack.c.h.b16 %v105
    %v194 = vunpack.c.l.b16 %v106
    %v195 = vunpack.c.h.b16 %v106
    %v196 = vunpack.c.l.b16 %v107
    %v197 = vunpack.c.h.b16 %v107
    %v198 = vunpack.c.l.b16 %v108
    %v199 = vunpack.c.h.b16 %v108
    %v200 = vunpack.c.l.b16 %v109
    %v201 = vunpack.c.h.b16 %v109
    %v202 = vunpack.c.l.b16 %v110
    %v203 = vunpack.c.h.b16 %v110
    %v204 = vunpack.c.l.b16 %v111
    %v205 = vunpack.c.h.b16 %v111
    %v206 = vunpack.c.l.b16 %v112
    %v207 = vunpack.c.h.b16 %v112
    %v208 = vunpack.c.l.b16 %v113
    %v209 = vunpack.c.h.b16 %v113
    %v210 = vunpack.c.l.b16 %v114
    %v211 = vunpack.c.h.b16 %v114
    %v212 = vunpack.c.l.b16 %v115
    %v213 = vunpack.c.h.b16 %v115
    %v214 = vunpack.c.l.b16 %v116
    %v215 = vunpack.c.h.b16 %v116
    %v216 = vunpack.c.l.b16 %v117
    %v217 = vunpack.c.h.b16 %v117
    %v218 = vunpack.c.l.b16 %v118
    %v219 = vunpack.c.h.b16 %v118
    %v220 = vunpack.c.l.b16 %v119
    %v221 = vunpack.c.h.b16 %v119
    %v222 = vunpack.c.l.b16 %v120
    %v223 = vunpack.c.h.b16 %v120
    %v224 = vunpack.c.l.b16 %v121
    %v225 = vunpack.c.h.b16 %v121
    %v226 = vunpack.c.l.b16 %v122
    %v227 = vunpack.c.h.b16 %v122
    %v228 = vunpack.c.l.b16 %v123
    %v229 = vunpack.c.h.b16 %v123
    %v230 = vunpack.c.l.b16 %v124
    %v231 = vunpack.c.h.b16 %v124
    %v232 = vunpack.c.l.b16 %v125
    %v233 = vunpack.c.h.b16 %v125
    %v234 = vunpack.c.l.b16 %v126
    %v235 = vunpack.c.h.b16 %v126
    %v236 = vunpack.c.l.b16 %v127
    %v237 = vunpack.c.h.b16 %v127
    %v238 = vunpack.c.l.b16 %v128
    %v239 = vunpack.c.h.b16 %v128
    %v240 = vunpack.c.l.b16 %v129
    %v241 = vunpack.c.h.b16 %v129
    %v242 = vunpack.c.l.b16 %v130
    %v243 = vunpack.c.h.b16 %v130
    %v244 = vunpack.c.l.b16 %v131
    %v245 = vunpack.c.h.b16 %v131
    %v246 = vunpack.c.l.b16 %v132
    %v247 = vunpack.c.h.b16 %v132
    %v248 = vunpack.c.l.b16 %v133
    %v249 = vunpack.c.h.b16 %v133
    %v250 = vunpack.c.l.b16 %v134
    %v251 = vunpack.c.h.b16 %v134
    %v252 = vunpack.c.l.b16 %v135
    %v253 = vunpack.c.h.b16 %v135
    %v254 = vpack.c.b16 %v192, %v190
    %v255 = vpack.c.b16 %v193, %v191
    %v256 = vpack.c.b16 %v196, %v194
    %v257 = vpack.c.b16 %v197, %v195
    %v258 = vpack.c.b16 %v200, %v198
    %v259 = vpack.c.b16 %v201, %v199
    %v260 = vpack.c.b16 %v204, %v202
    %v261 = vpack.c.b16 %v205, %v203
    %v262 = vpack.c.b16 %v208, %v206
    %v263 = vpack.c.b16 %v209, %v207
    %v264 = vpack.c.b16 %v212, %v210
    %v265 = vpack.c.b16 %v213, %v211
    %v266 = vpack.c.b16 %v216, %v214
    %v267 = vpack.c.b16 %v217, %v215
    %v268 = vpack.c.b16 %v220, %v218
    %v269 = vpack.c.b16 %v221, %v219
    %v270 = vpack.c.b16 %v224, %v222
    %v271 = vpack.c.b16 %v225, %v223
    %v272 = vpack.c.b16 %v228, %v226
    %v273 = vpack.c.b16 %v229, %v227
    %v274 = vpack.c.b16 %v232, %v230
    %v275 = vpack.c.b16 %v233, %v231
    %v276 = vpack.c.b16 %v236, %v234
    %v277 = vpack.c.b16 %v237, %v235
    %v278 = vpack.c.b16 %v240, %v238
    %v279 = vpack.c.b16 %v241, %v239
    %v280 = vpack.c.b16 %v244, %v242
    %v281 = vpack.c.b16 %v245, %v243
    %v282 = vpack.c.b16 %v248, %v246
    %v283 = vpack.c.b16 %v249, %v247
    %v284 = vpack.c.b16 %v252, %v250
    %v285 = vpack.c.b16 %v253, %v251
    %318 = vmatprep.subr.bf16.mxu0 %v269
    %319 = vmatpush1.bf16.msra.mxu0 %v268
    %320 = vmatprep.subr.bf16.mxu0 %v267
    %321 = vmatpush1.bf16.msra.mxu0 %v266
    %322 = vmatprep.subr.bf16.mxu0 %v265
    %323 = vmatpush1.bf16.msra.mxu0 %v264
    %324 = vmatprep.subr.bf16.mxu0 %v263
    %325 = vmatpush1.bf16.msra.mxu0 %v262
    %326 = vmatprep.subr.bf16.mxu0 %v261
    %327 = vmatpush1.bf16.msra.mxu0 %v260
    %328 = vmatprep.subr.bf16.mxu0 %v259
    %329 = vmatpush1.bf16.msra.mxu0 %v258
    %330 = vmatprep.subr.bf16.mxu0 %v257
    %331 = vmatpush1.bf16.msra.mxu0 %v256
    %332 = vmatprep.subr.bf16.mxu0 %v255
    %333 = vmatpush1.bf16.msra.mxu0 %v254
    %334 = vmatprep.subr.bf16.mxu0 %v285
    %335 = vmatpush2.bf16.msra.mxu0 %v284
    %336 = vmatprep.subr.bf16.mxu0 %v283
    %337 = vmatpush2.bf16.msra.mxu0 %v282
    %338 = vmatprep.subr.bf16.mxu0 %v281
    %339 = vmatpush2.bf16.msra.mxu0 %v280
    %340 = vmatprep.subr.bf16.mxu0 %v279
    %341 = vmatpush2.bf16.msra.mxu0 %v278
    %342 = vmatprep.subr.bf16.mxu0 %v277
    %343 = vmatpush2.bf16.msra.mxu0 %v276
    %344 = vmatprep.subr.bf16.mxu0 %v275
    %345 = vmatpush2.bf16.msra.mxu0 %v274
    %346 = vmatprep.subr.bf16.mxu0 %v273
    %347 = vmatpush2.bf16.msra.mxu0 %v272
    %348 = vmatprep.subr.bf16.mxu0 %v271
    %349 = vmatpush2.bf16.msra.mxu0 %v270
    %350 = vmatprep.mubr.bf16.mxu0 %v155
    %351 = vmatmul.mubr.bf16.gmra.mxu0 %v154
    %v352 = vpop.f32.mrf.mxu0
    %v353 = vadd.f32 %v141, %v352
    %v354 = vpop.f32.mrf.mxu0
    %v355 = vadd.f32 %v145, %v354
    %v356 = vpop.f32.mrf.mxu0
    %v357 = vadd.f32 %v141, %v356
    %v358 = vpop.f32.mrf.mxu0
    %v359 = vadd.f32 %v145, %v358
    %360 = vdwg.mxu0
    %v361 = vmax.f32 %v353, 0.0
    %v362 = vmax.f32 %v355, 0.0
    %v363 = vmax.f32 %v357, 0.0
    %v364 = vmax.f32 %v359, 0.0
    %v365 = vpack.c.bf16 %v363, %v361
    %v366 = vpack.c.bf16 %v364, %v362
    %v367 = vld [vmem:[#allocation7] sm:$0xff]
    %v368 = vld [vmem:[#allocation7 + $0x8] sm:$0xff]
    %v369 = vld [vmem:[#allocation7 + $0x10] sm:$0xff]
    %v370 = vld [vmem:[#allocation7 + $0x18] sm:$0xff]
    %v371 = vld [vmem:[#allocation7 + $0x20] sm:$0xff]
    %v372 = vld [vmem:[#allocation7 + $0x28] sm:$0xff]
    %v373 = vld [vmem:[#allocation7 + $0x30] sm:$0xff]
    %v374 = vld [vmem:[#allocation7 + $0x38] sm:$0xff]
    %v375 = vld [vmem:[#allocation7 + $0x40] sm:$0xff]
    %v376 = vld [vmem:[#allocation7 + $0x48] sm:$0xff]
    %v377 = vld [vmem:[#allocation7 + $0x50] sm:$0xff]
    %v378 = vld [vmem:[#allocation7 + $0x58] sm:$0xff]
    %v379 = vld [vmem:[#allocation7 + $0x60] sm:$0xff]
    %v380 = vld [vmem:[#allocation7 + $0x68] sm:$0xff]
    %v381 = vld [vmem:[#allocation7 + $0x70] sm:$0xff]
    %v382 = vld [vmem:[#allocation7 + $0x78] sm:$0xff]
    %v383 = vld [vmem:[#allocation7 + $0x80] sm:$0xff]
    %v384 = vld [vmem:[#allocation7 + $0x88] sm:$0xff]
    %v385 = vld [vmem:[#allocation7 + $0x90] sm:$0xff]
    %v386 = vld [vmem:[#allocation7 + $0x98] sm:$0xff]
    %v387 = vld [vmem:[#allocation7 + $0xa0] sm:$0xff]
    %v388 = vld [vmem:[#allocation7 + $0xa8] sm:$0xff]
    %v389 = vld [vmem:[#allocation7 + $0xb0] sm:$0xff]
    %v390 = vld [vmem:[#allocation7 + $0xb8] sm:$0xff]
    %v391 = vld [vmem:[#allocation7 + $0xc0] sm:$0xff]
    %v392 = vld [vmem:[#allocation7 + $0xc8] sm:$0xff]
    %v393 = vld [vmem:[#allocation7 + $0xd0] sm:$0xff]
    %v394 = vld [vmem:[#allocation7 + $0xd8] sm:$0xff]
    %v395 = vld [vmem:[#allocation7 + $0xe0] sm:$0xff]
    %v396 = vld [vmem:[#allocation7 + $0xe8] sm:$0xff]
    %v397 = vld [vmem:[#allocation7 + $0xf0] sm:$0xff]
    %v398 = vld [vmem:[#allocation7 + $0xf8] sm:$0xff]
    %v399 = vld [vmem:[%s4] sm:$0x3]
    %v401 = vlaneseq
    %v402 = vshrl.u32 %v401, 7
    %v403 = vsub.s32 0, %v402
    %v404 = vrot.slane %v399, %v403
    %v405 = vlaneseq
    %v406 = vshrl.u32 %v405, 7
    %v407 = vsub.s32 1, %v406
    %v408 = vrot.slane %v399, %v407
    %v443 = vunpack.c.l.b16 %v367
    %v444 = vunpack.c.h.b16 %v367
    %v445 = vunpack.c.l.b16 %v368
    %v446 = vunpack.c.h.b16 %v368
    %v447 = vunpack.c.l.b16 %v369
    %v448 = vunpack.c.h.b16 %v369
    %v449 = vunpack.c.l.b16 %v370
    %v450 = vunpack.c.h.b16 %v370
    %v451 = vunpack.c.l.b16 %v371
    %v452 = vunpack.c.h.b16 %v371
    %v453 = vunpack.c.l.b16 %v372
    %v454 = vunpack.c.h.b16 %v372
    %v455 = vunpack.c.l.b16 %v373
    %v456 = vunpack.c.h.b16 %v373
    %v457 = vunpack.c.l.b16 %v374
    %v458 = vunpack.c.h.b16 %v374
    %v459 = vunpack.c.l.b16 %v375
    %v460 = vunpack.c.h.b16 %v375
    %v461 = vunpack.c.l.b16 %v376
    %v462 = vunpack.c.h.b16 %v376
    %v463 = vunpack.c.l.b16 %v377
    %v464 = vunpack.c.h.b16 %v377
    %v465 = vunpack.c.l.b16 %v378
    %v466 = vunpack.c.h.b16 %v378
    %v467 = vunpack.c.l.b16 %v379
    %v468 = vunpack.c.h.b16 %v379
    %v469 = vunpack.c.l.b16 %v380
    %v470 = vunpack.c.h.b16 %v380
    %v471 = vunpack.c.l.b16 %v381
    %v472 = vunpack.c.h.b16 %v381
    %v473 = vunpack.c.l.b16 %v382
    %v474 = vunpack.c.h.b16 %v382
    %v475 = vunpack.c.l.b16 %v383
    %v476 = vunpack.c.h.b16 %v383
    %v477 = vunpack.c.l.b16 %v384
    %v478 = vunpack.c.h.b16 %v384
    %v479 = vunpack.c.l.b16 %v385
    %v480 = vunpack.c.h.b16 %v385
    %v481 = vunpack.c.l.b16 %v386
    %v482 = vunpack.c.h.b16 %v386
    %v483 = vunpack.c.l.b16 %v387
    %v484 = vunpack.c.h.b16 %v387
    %v485 = vunpack.c.l.b16 %v388
    %v486 = vunpack.c.h.b16 %v388
    %v487 = vunpack.c.l.b16 %v389
    %v488 = vunpack.c.h.b16 %v389
    %v489 = vunpack.c.l.b16 %v390
    %v490 = vunpack.c.h.b16 %v390
    %v491 = vunpack.c.l.b16 %v391
    %v492 = vunpack.c.h.b16 %v391
    %v493 = vunpack.c.l.b16 %v392
    %v494 = vunpack.c.h.b16 %v392
    %v495 = vunpack.c.l.b16 %v393
    %v496 = vunpack.c.h.b16 %v393
    %v497 = vunpack.c.l.b16 %v394
    %v498 = vunpack.c.h.b16 %v394
    %v499 = vunpack.c.l.b16 %v395
    %v500 = vunpack.c.h.b16 %v395
    %v501 = vunpack.c.l.b16 %v396
    %v502 = vunpack.c.h.b16 %v396
    %v503 = vunpack.c.l.b16 %v397
    %v504 = vunpack.c.h.b16 %v397
    %v505 = vunpack.c.l.b16 %v398
    %v506 = vunpack.c.h.b16 %v398
    %v507 = vpack.c.b16 %v445, %v443
    %v508 = vpack.c.b16 %v446, %v444
    %v509 = vpack.c.b16 %v449, %v447
    %v510 = vpack.c.b16 %v450, %v448
    %v511 = vpack.c.b16 %v453, %v451
    %v512 = vpack.c.b16 %v454, %v452
    %v513 = vpack.c.b16 %v457, %v455
    %v514 = vpack.c.b16 %v458, %v456
    %v515 = vpack.c.b16 %v461, %v459
    %v516 = vpack.c.b16 %v462, %v460
    %v517 = vpack.c.b16 %v465, %v463
    %v518 = vpack.c.b16 %v466, %v464
    %v519 = vpack.c.b16 %v469, %v467
    %v520 = vpack.c.b16 %v470, %v468
    %v521 = vpack.c.b16 %v473, %v471
    %v522 = vpack.c.b16 %v474, %v472
    %v523 = vpack.c.b16 %v477, %v475
    %v524 = vpack.c.b16 %v478, %v476
    %v525 = vpack.c.b16 %v481, %v479
    %v526 = vpack.c.b16 %v482, %v480
    %v527 = vpack.c.b16 %v485, %v483
    %v528 = vpack.c.b16 %v486, %v484
    %v529 = vpack.c.b16 %v489, %v487
    %v530 = vpack.c.b16 %v490, %v488
    %v531 = vpack.c.b16 %v493, %v491
    %v532 = vpack.c.b16 %v494, %v492
    %v533 = vpack.c.b16 %v497, %v495
    %v534 = vpack.c.b16 %v498, %v496
    %v535 = vpack.c.b16 %v501, %v499
    %v536 = vpack.c.b16 %v502, %v500
    %v537 = vpack.c.b16 %v505, %v503
    %v538 = vpack.c.b16 %v506, %v504
    %571 = vmatprep.subr.bf16.mxu0 %v522
    %572 = vmatpush1.bf16.msra.mxu0 %v521
    %573 = vmatprep.subr.bf16.mxu0 %v520
    %574 = vmatpush1.bf16.msra.mxu0 %v519
    %575 = vmatprep.subr.bf16.mxu0 %v518
    %576 = vmatpush1.bf16.msra.mxu0 %v517
    %577 = vmatprep.subr.bf16.mxu0 %v516
    %578 = vmatpush1.bf16.msra.mxu0 %v515
    %579 = vmatprep.subr.bf16.mxu0 %v514
    %580 = vmatpush1.bf16.msra.mxu0 %v513
    %581 = vmatprep.subr.bf16.mxu0 %v512
    %582 = vmatpush1.bf16.msra.mxu0 %v511
    %583 = vmatprep.subr.bf16.mxu0 %v510
    %584 = vmatpush1.bf16.msra.mxu0 %v509
    %585 = vmatprep.subr.bf16.mxu0 %v508
    %586 = vmatpush1.bf16.msra.mxu0 %v507
    %587 = vmatprep.subr.bf16.mxu0 %v538
    %588 = vmatpush2.bf16.msra.mxu0 %v537
    %589 = vmatprep.subr.bf16.mxu0 %v536
    %590 = vmatpush2.bf16.msra.mxu0 %v535
    %591 = vmatprep.subr.bf16.mxu0 %v534
    %592 = vmatpush2.bf16.msra.mxu0 %v533
    %593 = vmatprep.subr.bf16.mxu0 %v532
    %594 = vmatpush2.bf16.msra.mxu0 %v531
    %595 = vmatprep.subr.bf16.mxu0 %v530
    %596 = vmatpush2.bf16.msra.mxu0 %v529
    %597 = vmatprep.subr.bf16.mxu0 %v528
    %598 = vmatpush2.bf16.msra.mxu0 %v527
    %599 = vmatprep.subr.bf16.mxu0 %v526
    %600 = vmatpush2.bf16.msra.mxu0 %v525
    %601 = vmatprep.subr.bf16.mxu0 %v524
    %602 = vmatpush2.bf16.msra.mxu0 %v523
    %603 = vmatprep.mubr.bf16.mxu0 %v366
    %604 = vmatmul.mubr.bf16.gmra.mxu0 %v365
    %v605 = vpop.f32.mrf.mxu0
    %v606 = vadd.f32 %v404, %v605
    %v607 = vpop.f32.mrf.mxu0
    %v608 = vadd.f32 %v408, %v607
    %v609 = vpop.f32.mrf.mxu0
    %v610 = vadd.f32 %v404, %v609
    %v611 = vpop.f32.mrf.mxu0
    %v612 = vadd.f32 %v408, %v611
    %613 = vdwg.mxu0
    %v614 = vmax.f32 %v606, 0.0
    %v615 = vmax.f32 %v608, 0.0
    %v616 = vmax.f32 %v610, 0.0
    %v617 = vmax.f32 %v612, 0.0
    %v618 = vpack.c.bf16 %v616, %v614
    %v619 = vpack.c.bf16 %v617, %v615
    %v620 = vld [vmem:[#allocation8] sm:$0xff]
    %v621 = vld [vmem:[#allocation8 + $0x8] sm:$0xff]
    %v622 = vld [vmem:[#allocation8 + $0x10] sm:$0xff]
    %v623 = vld [vmem:[#allocation8 + $0x18] sm:$0xff]
    %v624 = vld [vmem:[#allocation8 + $0x20] sm:$0xff]
    %v625 = vld [vmem:[#allocation8 + $0x28] sm:$0xff]
    %v626 = vld [vmem:[#allocation8 + $0x30] sm:$0xff]
    %v627 = vld [vmem:[#allocation8 + $0x38] sm:$0xff]
    %v628 = vld [vmem:[#allocation8 + $0x40] sm:$0xff]
    %v629 = vld [vmem:[#allocation8 + $0x48] sm:$0xff]
    %v630 = vld [vmem:[#allocation8 + $0x50] sm:$0xff]
    %v631 = vld [vmem:[#allocation8 + $0x58] sm:$0xff]
    %v632 = vld [vmem:[#allocation8 + $0x60] sm:$0xff]
    %v633 = vld [vmem:[#allocation8 + $0x68] sm:$0xff]
    %v634 = vld [vmem:[#allocation8 + $0x70] sm:$0xff]
    %v635 = vld [vmem:[#allocation8 + $0x78] sm:$0xff]
    %v636 = vld [vmem:[#allocation8 + $0x80] sm:$0xff]
    %v637 = vld [vmem:[#allocation8 + $0x88] sm:$0xff]
    %v638 = vld [vmem:[#allocation8 + $0x90] sm:$0xff]
    %v639 = vld [vmem:[#allocation8 + $0x98] sm:$0xff]
    %v640 = vld [vmem:[#allocation8 + $0xa0] sm:$0xff]
    %v641 = vld [vmem:[#allocation8 + $0xa8] sm:$0xff]
    %v642 = vld [vmem:[#allocation8 + $0xb0] sm:$0xff]
    %v643 = vld [vmem:[#allocation8 + $0xb8] sm:$0xff]
    %v644 = vld [vmem:[#allocation8 + $0xc0] sm:$0xff]
    %v645 = vld [vmem:[#allocation8 + $0xc8] sm:$0xff]
    %v646 = vld [vmem:[#allocation8 + $0xd0] sm:$0xff]
    %v647 = vld [vmem:[#allocation8 + $0xd8] sm:$0xff]
    %v648 = vld [vmem:[#allocation8 + $0xe0] sm:$0xff]
    %v649 = vld [vmem:[#allocation8 + $0xe8] sm:$0xff]
    %v650 = vld [vmem:[#allocation8 + $0xf0] sm:$0xff]
    %v651 = vld [vmem:[#allocation8 + $0xf8] sm:$0xff]
    %v652 = vld [vmem:[%s6] sm:$0x3]
    %v654 = vlaneseq
    %v655 = vshrl.u32 %v654, 7
    %v656 = vsub.s32 0, %v655
    %v657 = vrot.slane %v652, %v656
    %v658 = vlaneseq
    %v659 = vshrl.u32 %v658, 7
    %v660 = vsub.s32 1, %v659
    %v661 = vrot.slane %v652, %v660
    %v696 = vunpack.c.l.b16 %v620
    %v697 = vunpack.c.h.b16 %v620
    %v698 = vunpack.c.l.b16 %v621
    %v699 = vunpack.c.h.b16 %v621
    %v700 = vunpack.c.l.b16 %v622
    %v701 = vunpack.c.h.b16 %v622
    %v702 = vunpack.c.l.b16 %v623
    %v703 = vunpack.c.h.b16 %v623
    %v704 = vunpack.c.l.b16 %v624
    %v705 = vunpack.c.h.b16 %v624
    %v706 = vunpack.c.l.b16 %v625
    %v707 = vunpack.c.h.b16 %v625
    %v708 = vunpack.c.l.b16 %v626
    %v709 = vunpack.c.h.b16 %v626
    %v710 = vunpack.c.l.b16 %v627
    %v711 = vunpack.c.h.b16 %v627
    %v712 = vunpack.c.l.b16 %v628
    %v713 = vunpack.c.h.b16 %v628
    %v714 = vunpack.c.l.b16 %v629
    %v715 = vunpack.c.h.b16 %v629
    %v716 = vunpack.c.l.b16 %v630
    %v717 = vunpack.c.h.b16 %v630
    %v718 = vunpack.c.l.b16 %v631
    %v719 = vunpack.c.h.b16 %v631
    %v720 = vunpack.c.l.b16 %v632
    %v721 = vunpack.c.h.b16 %v632
    %v722 = vunpack.c.l.b16 %v633
    %v723 = vunpack.c.h.b16 %v633
    %v724 = vunpack.c.l.b16 %v634
    %v725 = vunpack.c.h.b16 %v634
    %v726 = vunpack.c.l.b16 %v635
    %v727 = vunpack.c.h.b16 %v635
    %v728 = vunpack.c.l.b16 %v636
    %v729 = vunpack.c.h.b16 %v636
    %v730 = vunpack.c.l.b16 %v637
    %v731 = vunpack.c.h.b16 %v637
    %v732 = vunpack.c.l.b16 %v638
    %v733 = vunpack.c.h.b16 %v638
    %v734 = vunpack.c.l.b16 %v639
    %v735 = vunpack.c.h.b16 %v639
    %v736 = vunpack.c.l.b16 %v640
    %v737 = vunpack.c.h.b16 %v640
    %v738 = vunpack.c.l.b16 %v641
    %v739 = vunpack.c.h.b16 %v641
    %v740 = vunpack.c.l.b16 %v642
    %v741 = vunpack.c.h.b16 %v642
    %v742 = vunpack.c.l.b16 %v643
    %v743 = vunpack.c.h.b16 %v643
    %v744 = vunpack.c.l.b16 %v644
    %v745 = vunpack.c.h.b16 %v644
    %v746 = vunpack.c.l.b16 %v645
    %v747 = vunpack.c.h.b16 %v645
    %v748 = vunpack.c.l.b16 %v646
    %v749 = vunpack.c.h.b16 %v646
    %v750 = vunpack.c.l.b16 %v647
    %v751 = vunpack.c.h.b16 %v647
    %v752 = vunpack.c.l.b16 %v648
    %v753 = vunpack.c.h.b16 %v648
    %v754 = vunpack.c.l.b16 %v649
    %v755 = vunpack.c.h.b16 %v649
    %v756 = vunpack.c.l.b16 %v650
    %v757 = vunpack.c.h.b16 %v650
    %v758 = vunpack.c.l.b16 %v651
    %v759 = vunpack.c.h.b16 %v651
    %v760 = vpack.c.b16 %v698, %v696
    %v761 = vpack.c.b16 %v699, %v697
    %v762 = vpack.c.b16 %v702, %v700
    %v763 = vpack.c.b16 %v703, %v701
    %v764 = vpack.c.b16 %v706, %v704
    %v765 = vpack.c.b16 %v707, %v705
    %v766 = vpack.c.b16 %v710, %v708
    %v767 = vpack.c.b16 %v711, %v709
    %v768 = vpack.c.b16 %v714, %v712
    %v769 = vpack.c.b16 %v715, %v713
    %v770 = vpack.c.b16 %v718, %v716
    %v771 = vpack.c.b16 %v719, %v717
    %v772 = vpack.c.b16 %v722, %v720
    %v773 = vpack.c.b16 %v723, %v721
    %v774 = vpack.c.b16 %v726, %v724
    %v775 = vpack.c.b16 %v727, %v725
    %v776 = vpack.c.b16 %v730, %v728
    %v777 = vpack.c.b16 %v731, %v729
    %v778 = vpack.c.b16 %v734, %v732
    %v779 = vpack.c.b16 %v735, %v733
    %v780 = vpack.c.b16 %v738, %v736
    %v781 = vpack.c.b16 %v739, %v737
    %v782 = vpack.c.b16 %v742, %v740
    %v783 = vpack.c.b16 %v743, %v741
    %v784 = vpack.c.b16 %v746, %v744
    %v785 = vpack.c.b16 %v747, %v745
    %v786 = vpack.c.b16 %v750, %v748
    %v787 = vpack.c.b16 %v751, %v749
    %v788 = vpack.c.b16 %v754, %v752
    %v789 = vpack.c.b16 %v755, %v753
    %v790 = vpack.c.b16 %v758, %v756
    %v791 = vpack.c.b16 %v759, %v757
    %824 = vmatprep.subr.bf16.mxu0 %v775
    %825 = vmatpush1.bf16.msra.mxu0 %v774
    %826 = vmatprep.subr.bf16.mxu0 %v773
    %827 = vmatpush1.bf16.msra.mxu0 %v772
    %828 = vmatprep.subr.bf16.mxu0 %v771
    %829 = vmatpush1.bf16.msra.mxu0 %v770
    %830 = vmatprep.subr.bf16.mxu0 %v769
    %831 = vmatpush1.bf16.msra.mxu0 %v768
    %832 = vmatprep.subr.bf16.mxu0 %v767
    %833 = vmatpush1.bf16.msra.mxu0 %v766
    %834 = vmatprep.subr.bf16.mxu0 %v765
    %835 = vmatpush1.bf16.msra.mxu0 %v764
    %836 = vmatprep.subr.bf16.mxu0 %v763
    %837 = vmatpush1.bf16.msra.mxu0 %v762
    %838 = vmatprep.subr.bf16.mxu0 %v761
    %839 = vmatpush1.bf16.msra.mxu0 %v760
    %840 = vmatprep.subr.bf16.mxu0 %v791
    %841 = vmatpush2.bf16.msra.mxu0 %v790
    %842 = vmatprep.subr.bf16.mxu0 %v789
    %843 = vmatpush2.bf16.msra.mxu0 %v788
    %844 = vmatprep.subr.bf16.mxu0 %v787
    %845 = vmatpush2.bf16.msra.mxu0 %v786
    %846 = vmatprep.subr.bf16.mxu0 %v785
    %847 = vmatpush2.bf16.msra.mxu0 %v784
    %848 = vmatprep.subr.bf16.mxu0 %v783
    %849 = vmatpush2.bf16.msra.mxu0 %v782
    %850 = vmatprep.subr.bf16.mxu0 %v781
    %851 = vmatpush2.bf16.msra.mxu0 %v780
    %852 = vmatprep.subr.bf16.mxu0 %v779
    %853 = vmatpush2.bf16.msra.mxu0 %v778
    %854 = vmatprep.subr.bf16.mxu0 %v777
    %855 = vmatpush2.bf16.msra.mxu0 %v776
    %856 = vmatprep.mubr.bf16.mxu0 %v619
    %857 = vmatmul.mubr.bf16.gmra.mxu0 %v618
    %v858 = vpop.f32.mrf.mxu0
    %v859 = vadd.f32 %v657, %v858
    %v860 = vpop.f32.mrf.mxu0
    %v861 = vadd.f32 %v661, %v860
    %v862 = vpop.f32.mrf.mxu0
    %v863 = vadd.f32 %v657, %v862
    %v864 = vpop.f32.mrf.mxu0
    %v865 = vadd.f32 %v661, %v864
    %866 = vdwg.mxu0
    %v867 = vmax.f32 %v859, 0.0
    %v868 = vmax.f32 %v861, 0.0
    %v869 = vmax.f32 %v863, 0.0
    %v870 = vmax.f32 %v865, 0.0
    %v871 = vpack.c.bf16 %v869, %v867
    %v872 = vpack.c.bf16 %v870, %v868
    %v873 = vld [vmem:[#allocation10] sm:$0xf]
    %v874 = vld [vmem:[#allocation10 + $0x4] sm:$0xf]
    %v875 = vld [vmem:[#allocation10 + $0x8] sm:$0xf]
    %v876 = vld [vmem:[#allocation10 + $0xc] sm:$0xf]
    %v877 = vld [vmem:[#allocation10 + $0x10] sm:$0xf]
    %v878 = vld [vmem:[#allocation10 + $0x14] sm:$0xf]
    %v879 = vld [vmem:[#allocation10 + $0x18] sm:$0xf]
    %v880 = vld [vmem:[#allocation10 + $0x1c] sm:$0xf]
    %v881 = vld [vmem:[#allocation10 + $0x20] sm:$0xf]
    %v882 = vld [vmem:[#allocation10 + $0x24] sm:$0xf]
    %v883 = vld [vmem:[#allocation10 + $0x28] sm:$0xf]
    %v884 = vld [vmem:[#allocation10 + $0x2c] sm:$0xf]
    %v885 = vld [vmem:[#allocation10 + $0x30] sm:$0xf]
    %v886 = vld [vmem:[#allocation10 + $0x34] sm:$0xf]
    %v887 = vld [vmem:[#allocation10 + $0x38] sm:$0xf]
    %v888 = vld [vmem:[#allocation10 + $0x3c] sm:$0xf]
    %v889 = vld [vmem:[#allocation10 + $0x40] sm:$0xf]
    %v890 = vld [vmem:[#allocation10 + $0x44] sm:$0xf]
    %v891 = vld [vmem:[#allocation10 + $0x48] sm:$0xf]
    %v892 = vld [vmem:[#allocation10 + $0x4c] sm:$0xf]
    %v893 = vld [vmem:[#allocation10 + $0x50] sm:$0xf]
    %v894 = vld [vmem:[#allocation10 + $0x54] sm:$0xf]
    %v895 = vld [vmem:[#allocation10 + $0x58] sm:$0xf]
    %v896 = vld [vmem:[#allocation10 + $0x5c] sm:$0xf]
    %v897 = vld [vmem:[#allocation10 + $0x60] sm:$0xf]
    %v898 = vld [vmem:[#allocation10 + $0x64] sm:$0xf]
    %v899 = vld [vmem:[#allocation10 + $0x68] sm:$0xf]
    %v900 = vld [vmem:[#allocation10 + $0x6c] sm:$0xf]
    %v901 = vld [vmem:[#allocation10 + $0x70] sm:$0xf]
    %v902 = vld [vmem:[#allocation10 + $0x74] sm:$0xf]
    %v903 = vld [vmem:[#allocation10 + $0x78] sm:$0xf]
    %v904 = vld [vmem:[#allocation10 + $0x7c] sm:$0xf]
    %v905 = vld [vmem:[%s8] sm:$0x1]
    %v907 = vlaneseq
    %v908 = vshrl.u32 %v907, 7
    %v909 = vsub.s32 0, %v908
    %v910 = vrot.slane %v905, %v909
    %v944 = vunpack.c.l.b16 %v873
    %v945 = vunpack.c.l.b16 %v874
    %v946 = vunpack.c.l.b16 %v875
    %v947 = vunpack.c.l.b16 %v876
    %v948 = vunpack.c.l.b16 %v877
    %v949 = vunpack.c.l.b16 %v878
    %v950 = vunpack.c.l.b16 %v879
    %v951 = vunpack.c.l.b16 %v880
    %v952 = vunpack.c.l.b16 %v881
    %v953 = vunpack.c.l.b16 %v882
    %v954 = vunpack.c.l.b16 %v883
    %v955 = vunpack.c.l.b16 %v884
    %v956 = vunpack.c.l.b16 %v885
    %v957 = vunpack.c.l.b16 %v886
    %v958 = vunpack.c.l.b16 %v887
    %v959 = vunpack.c.l.b16 %v888
    %v960 = vunpack.c.l.b16 %v889
    %v961 = vunpack.c.l.b16 %v890
    %v962 = vunpack.c.l.b16 %v891
    %v963 = vunpack.c.l.b16 %v892
    %v964 = vunpack.c.l.b16 %v893
    %v965 = vunpack.c.l.b16 %v894
    %v966 = vunpack.c.l.b16 %v895
    %v967 = vunpack.c.l.b16 %v896
    %v968 = vunpack.c.l.b16 %v897
    %v969 = vunpack.c.l.b16 %v898
    %v970 = vunpack.c.l.b16 %v899
    %v971 = vunpack.c.l.b16 %v900
    %v972 = vunpack.c.l.b16 %v901
    %v973 = vunpack.c.l.b16 %v902
    %v974 = vunpack.c.l.b16 %v903
    %v975 = vunpack.c.l.b16 %v904
    %v976 = vpack.c.b16 %v945, %v944
    %v977 = vpack.c.b16 %v947, %v946
    %v978 = vpack.c.b16 %v949, %v948
    %v979 = vpack.c.b16 %v951, %v950
    %v980 = vpack.c.b16 %v953, %v952
    %v981 = vpack.c.b16 %v955, %v954
    %v982 = vpack.c.b16 %v957, %v956
    %v983 = vpack.c.b16 %v959, %v958
    %v984 = vpack.c.b16 %v961, %v960
    %v985 = vpack.c.b16 %v963, %v962
    %v986 = vpack.c.b16 %v965, %v964
    %v987 = vpack.c.b16 %v967, %v966
    %v988 = vpack.c.b16 %v969, %v968
    %v989 = vpack.c.b16 %v971, %v970
    %v990 = vpack.c.b16 %v973, %v972
    %v991 = vpack.c.b16 %v975, %v974
    %1008 = vmatprep.subr.bf16.mxu0 0
    %1009 = vmatpush1.bf16.msra.mxu0 %v983
    %1010 = vmatprep.subr.bf16.mxu0 0
    %1011 = vmatpush1.bf16.msra.mxu0 %v982
    %1012 = vmatprep.subr.bf16.mxu0 0
    %1013 = vmatpush1.bf16.msra.mxu0 %v981
    %1014 = vmatprep.subr.bf16.mxu0 0
    %1015 = vmatpush1.bf16.msra.mxu0 %v980
    %1016 = vmatprep.subr.bf16.mxu0 0
    %1017 = vmatpush1.bf16.msra.mxu0 %v979
    %1018 = vmatprep.subr.bf16.mxu0 0
    %1019 = vmatpush1.bf16.msra.mxu0 %v978
    %1020 = vmatprep.subr.bf16.mxu0 0
    %1021 = vmatpush1.bf16.msra.mxu0 %v977
    %1022 = vmatprep.subr.bf16.mxu0 0
    %1023 = vmatpush1.bf16.msra.mxu0 %v976
    %1024 = vmatprep.subr.bf16.mxu0 0
    %1025 = vmatpush2.bf16.msra.mxu0 %v991
    %1026 = vmatprep.subr.bf16.mxu0 0
    %1027 = vmatpush2.bf16.msra.mxu0 %v990
    %1028 = vmatprep.subr.bf16.mxu0 0
    %1029 = vmatpush2.bf16.msra.mxu0 %v989
    %1030 = vmatprep.subr.bf16.mxu0 0
    %1031 = vmatpush2.bf16.msra.mxu0 %v988
    %1032 = vmatprep.subr.bf16.mxu0 0
    %1033 = vmatpush2.bf16.msra.mxu0 %v987
    %1034 = vmatprep.subr.bf16.mxu0 0
    %1035 = vmatpush2.bf16.msra.mxu0 %v986
    %1036 = vmatprep.subr.bf16.mxu0 0
    %1037 = vmatpush2.bf16.msra.mxu0 %v985
    %1038 = vmatprep.subr.bf16.mxu0 0
    %1039 = vmatpush2.bf16.msra.mxu0 %v984
    %1040 = vmatprep.mubr.bf16.mxu0 %v872
    %1041 = vmatmul.mubr.bf16.gmra.mxu0 %v871
    %v1042 = vpop.f32.mrf.mxu0
    %v1043 = vadd.f32 %v910, %v1042
    %v1044 = vpop.f32.mrf.mxu0
    %v1045 = vpop.f32.mrf.mxu0
    %v1046 = vadd.f32 %v910, %v1045
    %v1047 = vpop.f32.mrf.mxu0
    %1048 = vdwg.mxu0
    %v1049 = vmax.f32 %v1043, 0.0
    %v1050 = vmax.f32 %v1046, 0.0
    %v1051 = vpack.c.bf16 %v1050, %v1049
    %v1053 = vunpack.c.l.b16 %v1051
    %v1054 = vunpack.c.h.b16 %v1051
    %v1055 = vpack.c.b16 %v1053, %v1053
    %v1056 = vpack.c.b16 %v1054, %v1054
    %1059 = vst [vmem:[#allocation11] sm:$0xf] %v1055
    %1060 = vst [vmem:[#allocation11 + $0x4] sm:$0xf] %v1056
    // Predicated region
    $region58: #{tpu_custom_call.1} parent=1 // pred_check
      _
    $region59: #{tpu_custom_call.1} parent=1 // pred_check_branch
      %1062 = sbr.rel (0) target = $region61
    $region60: #{tpu_custom_call.1} parent=1 // pred_region
      %s1064 = ssub.s32 128, 128
      %1065 = vsyncadd [#allocation4], %s1064
      %s1066 = sshll.u32 [#allocation11], 4
      %s1067 = int_to_ptr.vmem [resolvable:$true] %s1066
      %1072 = dma.vmem_to_hbm [thread:$0]  %s1067, 128, %s9, [#allocation4], 64, 64, 4
    $region61: #{tpu_custom_call.1} parent=1 // pred_fallthru
      _
    // Predicated region
    $region62: #{tpu_custom_call.1} parent=1 // pred_check
      _
    $region63: #{tpu_custom_call.1} parent=1 // pred_check_branch
      %1074 = sbr.rel (0) target = $region65
    $region64: #{tpu_custom_call.1} parent=1 // pred_region
      %1075 = dma.done [#allocation4], 128
    $region65: #{tpu_custom_call.1} parent=1 // pred_fallthru
      _
    %1076 = vsyncpa [#allocation3], 1
    %1077 = vsyncpa [#allocation6], 1
    %1078 = vsyncpa [#allocation9], 1
    %1079 = vsyncpa [#allocation4], 1

</llo_original>
